<compile_context>
chip_gen: v7x
topology: tpu7x:2x2x1
jax: 0.10.0
libtpu: 0.0.40
codegen_flags: <defaults>
</compile_context>

<pallas_src>
import functools

import jax
import jax.numpy as jnp
from jax.experimental import pallas as pl
from jax.experimental.pallas import tpu as pltpu


def _round_up(n, m):
    return ((n + m - 1) // m) * m


def _device_kind():
    try:
        return jax.devices()[0].device_kind.lower()
    except Exception:  # pragma: no cover - detection failure is non-fatal
        return ""


def jaspar_kernel(x_ref, a_ref, w_ref, b_ref, out_ref, *, bf16_elu):
    # x_ref:   (TB, C*L)        bf16  one batch block, flattened input
    # a_ref:   (C*L, FLp)       bf16  Toeplitz conv matrix (pad+im2col+taps)
    # w_ref:   (FLp, NC)        bf16  linear weight (torch.flatten(1) order)
    # b_ref:   (1, NC)          f32   linear bias
    # out_ref: (TB, NC)         f32
    x = x_ref[...]                                            # bf16

    # conv1d over all taps / filters / output positions as ONE matmul,
    # f32 accumulation on the MXU.
    conv = jnp.dot(x, a_ref[...], preferred_element_type=jnp.float32)

    # ELU (alpha = 1.0).  bf16 path on chips with bf16 VPU/EUP (v6e/v7x),
    # f32 path on v5e.
    if bf16_elu:
        c = conv.astype(jnp.bfloat16)
        feat = jnp.where(c > 0, c, jnp.exp(c) - 1.0).astype(jnp.bfloat16)
    else:
        feat = jnp.where(conv > 0, conv,
                         jnp.exp(conv) - 1.0).astype(jnp.bfloat16)

    # flatten(1) + Linear as one matmul + bias broadcast.
    out = jnp.dot(feat, w_ref[...], preferred_element_type=jnp.float32)
    out_ref[...] = (out + b_ref[...]).astype(out_ref.dtype)


def jaspar_forward(x, filters, w_lin, b_lin, *, padding, stride=1,
                   block_batch=None):
    """x: (B, 4, L); filters: (F, 4, K); w_lin: (F*L_out, NC); b_lin: (NC,)."""
    assert stride == 1  # the module always sets stride=1 in practice
    B, C, L = x.shape
    F, Cf, K = filters.shape
    assert C == Cf
    L_out = (L + 2 * padding - K) // stride + 1
    FL = F * L_out
    FLp = _round_up(FL, 128)                      # lane-align conv width
    NC = w_lin.shape[1]
    assert w_lin.shape[0] == FL

    kind = _device_kind()
    is_v5 = "v5" in kind
    bf16_elu = not is_v5
    if block_batch is None:
        # v5e has a 16 MiB scoped-VMEM default; v6e/v7x have 32 MiB.
        block_batch = 2048 if is_v5 else 8192

    # ---- one-time, batch-independent parameter packing (tiny arrays) -----
    # A[c*L + t, f*L_out + l] = filters[f, c, t - l + padding] if that tap
    # index lies in [0, K), else 0 (the tap falls in the zero padding).
    t_idx = jnp.arange(L)
    l_idx = jnp.arange(L_out)
    k = t_idx[:, None] - l_idx[None, :] + padding            # (L, L_out)
    valid = (k >= 0) & (k < K)
    k_c = jnp.clip(k, 0, K - 1)
    gath = filters.astype(jnp.float32)[:, :, k_c]            # (F, C, L, L_out)
    gath = jnp.where(valid[None, None], gath, 0.0)
    a_mat = gath.transpose(1, 2, 0, 3).reshape(C * L, FL)
    if FLp != FL:                                            # zero cols (tiny)
        a_mat = jnp.pad(a_mat, ((0, 0), (0, FLp - FL)))
    a_mat = a_mat.astype(jnp.bfloat16)                       # (C*L, FLp)
    w_f32 = w_lin.astype(jnp.float32)
    if FLp != FL:                                            # zero rows (tiny)
        w_f32 = jnp.pad(w_f32, ((0, FLp - FL), (0, 0)))
    w_bf = w_f32.astype(jnp.bfloat16)                        # (FLp, NC)
    b2 = b_lin.reshape(1, NC).astype(jnp.float32)            # (1, NC)

    # ---- input: free row-major reshape; stream as bf16, no padded copy ----
    x2 = x.reshape(B, C * L)
    if x2.dtype != jnp.bfloat16:
        x2 = x2.astype(jnp.bfloat16)

    # ---- batch tiling: cdiv grid, partial last block instead of jnp.pad ---
    if B < 16:
        tb = B                                   # block dims == array dims
    else:
        tb = min(block_batch, (B // 16) * 16)    # multiple of 16 (bf16 pack)
    grid = pl.cdiv(B, tb)

    kernel = functools.partial(jaspar_kernel, bf16_elu=bf16_elu)

    out = pl.pallas_call(
        kernel,
        out_shape=jax.ShapeDtypeStruct((B, NC), jnp.float32),
        grid_spec=pltpu.PrefetchScalarGridSpec(
            num_scalar_prefetch=0,
            grid=(grid,),
            in_specs=[
                pl.BlockSpec((tb, C * L), lambda i: (i, 0)),
                pl.BlockSpec((C * L, FLp), lambda i: (0, 0)),
                pl.BlockSpec((FLp, NC), lambda i: (0, 0)),
                pl.BlockSpec((1, NC), lambda i: (0, 0)),
            ],
            out_specs=pl.BlockSpec((tb, NC), lambda i: (i, 0)),
        ),
        compiler_params=pltpu.CompilerParams(
            dimension_semantics=("parallel",)),
    )(x2, a_mat, w_bf, b2)
    return out


if __name__ == "__main__":
    key = jax.random.PRNGKey(0)
    B, C, L = 2, 4, 16
    num_classes = 3
    stride = 1

    # Synthetic JASPAR-like PPMs of varying length, right-zero-padded to max
    # length (mirrors Helper.get_filters + ConstantPad1d in __init__).
    lengths = [5, 3, 4, 5, 2, 4]
    max_filter_len = max(lengths)
    n_filters = len(lengths)
    mats = []
    for ln in lengths:
        key, sub = jax.random.split(key)
        logits = jax.random.normal(sub, (C, ln), dtype=jnp.float32)
        ppm = jax.nn.softmax(logits, axis=0)          # columns sum to 1 (PPM)
        ppm = jnp.pad(ppm, ((0, 0), (0, max_filter_len - ln)))
        mats.append(ppm)
    filters = jnp.stack(mats, axis=0)                 # (F, 4, K)

    padding = max_filter_len - 1                      # as in __init__
    L_out = (L + 2 * padding - max_filter_len) // stride + 1
    D = n_filters * L_out

    key, kw, kb, kx = jax.random.split(key, 4)
    w_lin = 0.1 * jax.random.normal(kw, (D, num_classes), dtype=jnp.float32)
    b_lin = 0.1 * jax.random.normal(kb, (num_classes,), dtype=jnp.float32)

    # one-hot DNA-like input in NCL layout, built directly in bf16 so the
    # kernel streams half the bytes (values are exactly representable).
    idx = jax.random.randint(kx, (B, L), 0, C)
    x = jax.nn.one_hot(idx, C, dtype=jnp.bfloat16).transpose(0, 2, 1)  # (B,4,L)

    out = jaspar_forward(x, filters, w_lin, b_lin,
                         padding=padding, stride=stride)
    out = jax.block_until_ready(out)

    # pure-JAX reference (conv1d + ELU + flatten + Linear), full precision
    x_f32 = x.astype(jnp.float32)
    conv = jax.lax.conv_general_dilated(
        x_f32, filters, window_strides=(stride,), padding=[(padding, padding)],
        dimension_numbers=("NCH", "OIH", "NCH"),
        precision=jax.lax.Precision.HIGHEST)
    feat = jnp.where(conv > 0, conv, jnp.exp(conv) - 1.0).reshape(B, -1)
    ref = feat @ w_lin + b_lin

    assert out.shape == (B, num_classes)
    assert jnp.allclose(out, ref, atol=5e-2, rtol=5e-2)
    print("KERNEL_OK")
</pallas_src>

<mosaic_0001>
module attributes {stable_mosaic.version = 11 : i64} {
  func.func @jaspar_kernel(%arg0: i32, %arg1: memref<2x64xbf16, #tpu.memory_space<vmem>>, %arg2: memref<64x128xbf16, #tpu.memory_space<vmem>>, %arg3: memref<128x3xbf16, #tpu.memory_space<vmem>>, %arg4: memref<1x3xf32, #tpu.memory_space<vmem>>, %arg5: memref<2x3xf32, #tpu.memory_space<vmem>>) attributes {dimension_semantics = [#tpu.dimension_semantics<parallel>], iteration_bounds = array<i64: 1>, scalar_prefetch = 0 : i64, scratch_operands = 0 : i64, tpu.core_type = #tpu.core_type<tc>, window_params = [{transform_indices = @transform_0, window_bounds = array<i64: 2, 64>}, {pipeline_mode = #tpu.pipeline_mode<synchronous>, transform_indices = @transform_1, window_bounds = array<i64: 64, 128>}, {pipeline_mode = #tpu.pipeline_mode<synchronous>, transform_indices = @transform_2, window_bounds = array<i64: 128, 3>}, {pipeline_mode = #tpu.pipeline_mode<synchronous>, transform_indices = @transform_3, window_bounds = array<i64: 1, 3>}, {transform_indices = @transform_4, window_bounds = array<i64: 2, 3>}]} {
    %c0 = arith.constant 0 : index
    %c0_0 = arith.constant 0 : index
    %0 = vector.load %arg1[%c0, %c0_0] : memref<2x64xbf16, #tpu.memory_space<vmem>>, vector<2x64xbf16>
    %c0_1 = arith.constant 0 : index
    %c0_2 = arith.constant 0 : index
    %1 = vector.load %arg2[%c0_1, %c0_2] : memref<64x128xbf16, #tpu.memory_space<vmem>>, vector<64x128xbf16>
    %cst = arith.constant dense<0.000000e+00> : vector<2x128xf32>
    %2 = tpu.matmul %0, %1, %cst {dimension_numbers = #tpu.dot_dimension_numbers<[1], [0], [0], [1], [0, 0, 1, 1], [], []>} : vector<2x64xbf16>, vector<64x128xbf16>, vector<2x128xf32> -> vector<2x128xf32>
    %3 = arith.truncf %2 : vector<2x128xf32> to vector<2x128xbf16>
    %cst_3 = arith.constant 0.000000e+00 : bf16
    %4 = vector.broadcast %cst_3 : bf16 to vector<2x128xbf16>
    %5 = arith.cmpf ogt, %3, %4 : vector<2x128xbf16>
    %6 = math.exp %3 : vector<2x128xbf16>
    %cst_4 = arith.constant 1.000000e+00 : bf16
    %7 = vector.broadcast %cst_4 : bf16 to vector<2x128xbf16>
    %8 = arith.subf %6, %7 : vector<2x128xbf16>
    %9 = arith.select %5, %3, %8 : vector<2x128xi1>, vector<2x128xbf16>
    %c0_5 = arith.constant 0 : index
    %c0_6 = arith.constant 0 : index
    %10 = vector.load %arg3[%c0_5, %c0_6] : memref<128x3xbf16, #tpu.memory_space<vmem>>, vector<128x3xbf16>
    %cst_7 = arith.constant dense<0.000000e+00> : vector<2x3xf32>
    %11 = tpu.matmul %9, %10, %cst_7 {dimension_numbers = #tpu.dot_dimension_numbers<[1], [0], [0], [1], [0, 0, 1, 1], [], []>} : vector<2x128xbf16>, vector<128x3xbf16>, vector<2x3xf32> -> vector<2x3xf32>
    %c0_8 = arith.constant 0 : index
    %c0_9 = arith.constant 0 : index
    %12 = vector.load %arg4[%c0_8, %c0_9] : memref<1x3xf32, #tpu.memory_space<vmem>>, vector<1x3xf32>
    %13 = vector.broadcast %12 : vector<1x3xf32> to vector<2x3xf32>
    %14 = arith.addf %11, %13 : vector<2x3xf32>
    %c0_10 = arith.constant 0 : index
    %c0_11 = arith.constant 0 : index
    %15 = vector.load %arg5[%c0_10, %c0_11] : memref<2x3xf32, #tpu.memory_space<vmem>>, vector<2x3xf32>
    tpu.vector_store %arg5[%c0_10, %c0_11], %14 {strides = array<i32>} : memref<2x3xf32, #tpu.memory_space<vmem>>, vector<2x3xf32>,
    return
  }
  func.func @transform_0(%arg0: i32) -> (i32, i32) {
    %c0_i32 = arith.constant 0 : i32
    %c0_i32_0 = arith.constant 0 : i32
    return %arg0, %c0_i32 : i32, i32
  }
  func.func @transform_1(%arg0: i32) -> (i32, i32) {
    %c0_i32 = arith.constant 0 : i32
    %c0_i32_0 = arith.constant 0 : i32
    %c0_i32_1 = arith.constant 0 : i32
    return %c0_i32, %c0_i32_0 : i32, i32
  }
  func.func @transform_2(%arg0: i32) -> (i32, i32) {
    %c0_i32 = arith.constant 0 : i32
    %c0_i32_0 = arith.constant 0 : i32
    %c0_i32_1 = arith.constant 0 : i32
    return %c0_i32, %c0_i32_0 : i32, i32
  }
  func.func @transform_3(%arg0: i32) -> (i32, i32) {
    %c0_i32 = arith.constant 0 : i32
    %c0_i32_0 = arith.constant 0 : i32
    %c0_i32_1 = arith.constant 0 : i32
    return %c0_i32, %c0_i32_0 : i32, i32
  }
  func.func @transform_4(%arg0: i32) -> (i32, i32) {
    %c0_i32 = arith.constant 0 : i32
    %c0_i32_0 = arith.constant 0 : i32
    return %arg0, %c0_i32 : i32, i32
  }
}

</mosaic_0001>

<llo_original>
// kernel: tpu_custom_call.1
$region0: #{tpu_custom_call.1}
  #allocation0 [shape = 'u32[]', space=smem, size = 0x4, offset = 0x4, fixed_abs, tag = 'smem constant byte address 0x4 - core index']
  #allocation1 [shape = 'u32[144,128]{1,0:T(1,128)}', space=vmem, size = 0x12000, scoped, tag = 'internal scratch']
  %s0 = inlined_call_operand.vmem [shape: bf16[2,64], index: 0, kind: input, shape index: {}]
  %s1 = inlined_call_operand.vmem [shape: bf16[64,128], index: 1, kind: input, shape index: {}]
  %s2 = inlined_call_operand.vmem [shape: bf16[128,3], index: 2, kind: input, shape index: {}]
  %s3 = inlined_call_operand.vmem [shape: f32[1,3], index: 3, kind: input, shape index: {}]
  %s4 = inlined_call_operand.hbm [shape: f32[2,3], index: 4, kind: output, shape index: {}]
  %s5 = sld [smem:[#allocation0]]
  $region26: #{tpu_custom_call.1} parent=0
    _
  %s7 = ssub.s32 1, %s5
  %s8 = scalar_select 0, %s7, %s5
  $region1: #{tpu_custom_call.1} parent=0
    #allocation2 [shape = 'u8[1024]{0}', space=vmem, size = 0x400, scoped, tag = 'output window, operand 0, single buffered']
    #allocation3 [shape = 's32[1]{0}', space=sflag, size = 0x4, scoped, tag = 'scoped memory for tpu_custom_call.1']
    %9 = vsyncpa [#allocation3], 0
    // Predicated region
    $region2: #{tpu_custom_call.1} parent=1 // pred_check
      _
    $region3: #{tpu_custom_call.1} parent=1 // pred_check_branch
      %11 = sbr.rel (0) target = $region5
    $region4: #{tpu_custom_call.1} parent=1 // pred_region
      _
    $region5: #{tpu_custom_call.1} parent=1 // pred_fallthru
      _
    // Predicated region
    $region6: #{tpu_custom_call.1} parent=1 // pred_check
      _
    $region7: #{tpu_custom_call.1} parent=1 // pred_check_branch
      %13 = sbr.rel (0) target = $region9
    $region8: #{tpu_custom_call.1} parent=1 // pred_region
      _
    $region9: #{tpu_custom_call.1} parent=1 // pred_fallthru
      _
    // Predicated region
    $region10: #{tpu_custom_call.1} parent=1 // pred_check
      _
    $region11: #{tpu_custom_call.1} parent=1 // pred_check_branch
      %15 = sbr.rel (0) target = $region13
    $region12: #{tpu_custom_call.1} parent=1 // pred_region
      _
    $region13: #{tpu_custom_call.1} parent=1 // pred_fallthru
      _
    // Predicated region
    $region14: #{tpu_custom_call.1} parent=1 // pred_check
      _
    $region15: #{tpu_custom_call.1} parent=1 // pred_check_branch
      %17 = sbr.rel (0) target = $region17
    $region16: #{tpu_custom_call.1} parent=1 // pred_region
      _
    $region17: #{tpu_custom_call.1} parent=1 // pred_fallthru
      _
    %v20 = vld [vmem:[%s0] sm:$0x1]
    %v21 = vld [vmem:[%s1] sm:$0xf]
    %v22 = vld [vmem:[%s1 + $0x4] sm:$0xf]
    %v23 = vld [vmem:[%s1 + $0x8] sm:$0xf]
    %v24 = vld [vmem:[%s1 + $0xc] sm:$0xf]
    %v25 = vld [vmem:[%s1 + $0x10] sm:$0xf]
    %v26 = vld [vmem:[%s1 + $0x14] sm:$0xf]
    %v27 = vld [vmem:[%s1 + $0x18] sm:$0xf]
    %v28 = vld [vmem:[%s1 + $0x1c] sm:$0xf]
    %v37 = vunpack.c.l.b16 %v21
    %v38 = vunpack.c.l.b16 %v22
    %v39 = vunpack.c.l.b16 %v23
    %v40 = vunpack.c.l.b16 %v24
    %v41 = vunpack.c.l.b16 %v25
    %v42 = vunpack.c.l.b16 %v26
    %v43 = vunpack.c.l.b16 %v27
    %v44 = vunpack.c.l.b16 %v28
    %v45 = vpack.c.b16 %v38, %v37
    %v46 = vpack.c.b16 %v40, %v39
    %v47 = vpack.c.b16 %v42, %v41
    %v48 = vpack.c.b16 %v44, %v43
    %vm53 = vcmask 523264
    %v55 = vsel %vm53, %v20, 0
    %57 = vmatprep.subr.bf16.mxu0 0
    %58 = vmatpush1.bf16.msra.mxu0 %v45
    %59 = vmatprep.subr.bf16.mxu0 0
    %60 = vmatpush1.bf16.msra.mxu0 %v46
    %61 = vmatprep.subr.bf16.mxu0 0
    %62 = vmatpush1.bf16.msra.mxu0 %v47
    %63 = vmatprep.subr.bf16.mxu0 0
    %64 = vmatpush1.bf16.msra.mxu0 %v48
    %65 = vmatprep.subr.bf16.mxu0 0
    %66 = vmatpush1.bf16.msra.mxu0 0
    %67 = vmatprep.subr.bf16.mxu0 0
    %68 = vmatpush1.bf16.msra.mxu0 0
    %69 = vmatprep.subr.bf16.mxu0 0
    %70 = vmatpush1.bf16.msra.mxu0 0
    %71 = vmatprep.subr.bf16.mxu0 0
    %72 = vmatpush1.bf16.msra.mxu0 0
    %73 = vmatprep.subr.bf16.mxu0 0
    %74 = vmatpush1.bf16.msra.mxu0 0
    %75 = vmatprep.subr.bf16.mxu0 0
    %76 = vmatpush1.bf16.msra.mxu0 0
    %77 = vmatprep.subr.bf16.mxu0 0
    %78 = vmatpush1.bf16.msra.mxu0 0
    %79 = vmatprep.subr.bf16.mxu0 0
    %80 = vmatpush1.bf16.msra.mxu0 0
    %81 = vmatprep.subr.bf16.mxu0 0
    %82 = vmatpush1.bf16.msra.mxu0 0
    %83 = vmatprep.subr.bf16.mxu0 0
    %84 = vmatpush1.bf16.msra.mxu0 0
    %85 = vmatprep.subr.bf16.mxu0 0
    %86 = vmatpush1.bf16.msra.mxu0 0
    %87 = vmatprep.subr.bf16.mxu0 0
    %88 = vmatpush1.bf16.msra.mxu0 0
    %89 = vmatprep.mubr.bf16.mxu0 0
    %90 = vmatmul.mubr.bf16.gmra.mrb[0].mxu0 %v55
    %v91 = vpop.f32.mrb[0].mxu0
    %v92 = vadd.f32 0.0, %v91
    %v93 = vpop.f32.mrb[0].mxu0
    %v94 = vpop.f32.mrb[0].mxu0
    %v95 = vpop.f32.mrb[0].mxu0
    %96 = vdwg.mxu0
    %v97 = vpack.c.bf16 %v92, %v92
    %vm98 = vcmp.gt.bf16.partialorder %v97, 0
    %v100 = vmul.bf16 %v97, 1069105081
    %v101 = vpow.bf16.pop %v100
    %v102 = vsub.bf16 %v101, 1065369472
    %v103 = vsel %vm98, %v97, %v102
    %v104 = vld [vmem:[%s2] sm:$0xf]
    %v105 = vld [vmem:[%s2 + $0x4] sm:$0xf]
    %v106 = vld [vmem:[%s2 + $0x8] sm:$0xf]
    %v107 = vld [vmem:[%s2 + $0xc] sm:$0xf]
    %v108 = vld [vmem:[%s2 + $0x10] sm:$0xf]
    %v109 = vld [vmem:[%s2 + $0x14] sm:$0xf]
    %v110 = vld [vmem:[%s2 + $0x18] sm:$0xf]
    %v111 = vld [vmem:[%s2 + $0x1c] sm:$0xf]
    %v112 = vld [vmem:[%s2 + $0x20] sm:$0xf]
    %v113 = vld [vmem:[%s2 + $0x24] sm:$0xf]
    %v114 = vld [vmem:[%s2 + $0x28] sm:$0xf]
    %v115 = vld [vmem:[%s2 + $0x2c] sm:$0xf]
    %v116 = vld [vmem:[%s2 + $0x30] sm:$0xf]
    %v117 = vld [vmem:[%s2 + $0x34] sm:$0xf]
    %v118 = vld [vmem:[%s2 + $0x38] sm:$0xf]
    %v119 = vld [vmem:[%s2 + $0x3c] sm:$0xf]
    %v120 = vld [vmem:[%s3] sm:$0x1]
    %v122 = vlaneseq
    %v123 = vshrl.u32 %v122, 7
    %v124 = vsub.s32 0, %v123
    %v125 = vrot.slane %v120, %v124
    %v143 = vunpack.c.l.b16 %v104
    %v144 = vunpack.c.l.b16 %v105
    %v145 = vunpack.c.l.b16 %v106
    %v146 = vunpack.c.l.b16 %v107
    %v147 = vunpack.c.l.b16 %v108
    %v148 = vunpack.c.l.b16 %v109
    %v149 = vunpack.c.l.b16 %v110
    %v150 = vunpack.c.l.b16 %v111
    %v151 = vunpack.c.l.b16 %v112
    %v152 = vunpack.c.l.b16 %v113
    %v153 = vunpack.c.l.b16 %v114
    %v154 = vunpack.c.l.b16 %v115
    %v155 = vunpack.c.l.b16 %v116
    %v156 = vunpack.c.l.b16 %v117
    %v157 = vunpack.c.l.b16 %v118
    %v158 = vunpack.c.l.b16 %v119
    %v159 = vpack.c.b16 %v144, %v143
    %v160 = vpack.c.b16 %v146, %v145
    %v161 = vpack.c.b16 %v148, %v147
    %v162 = vpack.c.b16 %v150, %v149
    %v163 = vpack.c.b16 %v152, %v151
    %v164 = vpack.c.b16 %v154, %v153
    %v165 = vpack.c.b16 %v156, %v155
    %v166 = vpack.c.b16 %v158, %v157
    %175 = vmatprep.subr.bf16.mxu0 0
    %176 = vmatpush1.bf16.msra.mxu0 %v159
    %177 = vmatprep.subr.bf16.mxu0 0
    %178 = vmatpush1.bf16.msra.mxu0 %v160
    %179 = vmatprep.subr.bf16.mxu0 0
    %180 = vmatpush1.bf16.msra.mxu0 %v161
    %181 = vmatprep.subr.bf16.mxu0 0
    %182 = vmatpush1.bf16.msra.mxu0 %v162
    %183 = vmatprep.subr.bf16.mxu0 0
    %184 = vmatpush1.bf16.msra.mxu0 %v163
    %185 = vmatprep.subr.bf16.mxu0 0
    %186 = vmatpush1.bf16.msra.mxu0 %v164
    %187 = vmatprep.subr.bf16.mxu0 0
    %188 = vmatpush1.bf16.msra.mxu0 %v165
    %189 = vmatprep.subr.bf16.mxu0 0
    %190 = vmatpush1.bf16.msra.mxu0 %v166
    %191 = vmatprep.subr.bf16.mxu0 0
    %192 = vmatpush1.bf16.msra.mxu0 0
    %193 = vmatprep.subr.bf16.mxu0 0
    %194 = vmatpush1.bf16.msra.mxu0 0
    %195 = vmatprep.subr.bf16.mxu0 0
    %196 = vmatpush1.bf16.msra.mxu0 0
    %197 = vmatprep.subr.bf16.mxu0 0
    %198 = vmatpush1.bf16.msra.mxu0 0
    %199 = vmatprep.subr.bf16.mxu0 0
    %200 = vmatpush1.bf16.msra.mxu0 0
    %201 = vmatprep.subr.bf16.mxu0 0
    %202 = vmatpush1.bf16.msra.mxu0 0
    %203 = vmatprep.subr.bf16.mxu0 0
    %204 = vmatpush1.bf16.msra.mxu0 0
    %205 = vmatprep.subr.bf16.mxu0 0
    %206 = vmatpush1.bf16.msra.mxu0 0
    %207 = vmatprep.mubr.bf16.mxu0 0
    %208 = vmatmul.mubr.bf16.gmra.mrb[0].mxu0 %v103
    %v209 = vpop.f32.mrb[0].mxu0
    %v210 = vadd.f32 %v125, %v209
    %v211 = vpop.f32.mrb[0].mxu0
    %v212 = vpop.f32.mrb[0].mxu0
    %v213 = vpop.f32.mrb[0].mxu0
    %214 = vdwg.mxu0
    %vm215 = vcmask 17408
    %216 = vst.msk [vmem:[#allocation2] sm:$0x3] %vm215, %v210
    // Predicated region
    $region18: #{tpu_custom_call.1} parent=1 // pred_check
      _
    $region19: #{tpu_custom_call.1} parent=1 // pred_check_branch
      %218 = sbr.rel (0) target = $region21
    $region20: #{tpu_custom_call.1} parent=1 // pred_region
      %s220 = ssub.s32 32, 32
      %221 = vsyncadd [#allocation3], %s220
      %s223 = sshll.u32 [#allocation2], 4
      %s224 = int_to_ptr.vmem [resolvable:$true] %s223
      %226 = dma.vmem_to_hbm [thread:$0]  %s224, 32, %s4, [#allocation3]
    $region21: #{tpu_custom_call.1} parent=1 // pred_fallthru
      _
    // Predicated region
    $region22: #{tpu_custom_call.1} parent=1 // pred_check
      _
    $region23: #{tpu_custom_call.1} parent=1 // pred_check_branch
      %228 = sbr.rel (0) target = $region25
    $region24: #{tpu_custom_call.1} parent=1 // pred_region
      %229 = dma.done [#allocation3], 32
    $region25: #{tpu_custom_call.1} parent=1 // pred_fallthru
      _
    %230 = vsyncpa [#allocation3], 1

</llo_original>
